<compile_context>
chip_gen: v5e
topology: v5e:2x2
jax: 0.10.0
libtpu: 0.0.40
codegen_flags: <defaults>
</compile_context>

<pallas_src>
import numpy as np
import jax
import jax.numpy as jnp
from jax.experimental import pallas as pl
from jax.experimental.pallas import tpu as pltpu


_VMEM_LIMIT = 32 * 1024 * 1024         # safe scoped-VMEM request on v5e/v6e/v7x
_VMEM_TILE_BUDGET = 12 * 1024 * 1024   # per-call tile budget (double-buffered blocks + scratch)


# ----------------------------------------------------------------------------
# D4 (p4m stabilizer) group tables: element g = m*4 + r  <->  T_g = Flip^m o Rot^r
# ----------------------------------------------------------------------------
def _d4_tables():
    R = np.array([[0, -1], [1, 0]])     # 90 deg CCW rotation
    F = np.array([[1, 0], [0, -1]])     # mirror
    mats = []
    for m in range(2):
        for r in range(4):
            mats.append(np.linalg.matrix_power(F, m) @ np.linalg.matrix_power(R, r))

    def idx(M):
        for i, Mi in enumerate(mats):
            if np.array_equal(M, Mi):
                return i
        raise ValueError("not a D4 element")

    compose = np.zeros((8, 8), dtype=np.int32)
    inv = np.zeros((8,), dtype=np.int32)
    for a in range(8):
        for b in range(8):
            compose[a, b] = idx(mats[a] @ mats[b])
        inv[a] = idx(np.rint(np.linalg.inv(mats[a])).astype(np.int64))
    return compose, inv


_D4_COMPOSE, _D4_INV = _d4_tables()


def p4m_transform_filter(w):
    """w: (Co, Ci, 8, k, k) p4m weight -> HWIO filter (k, k, Ci*8, Co*8).

    For each output group element g:
      w_g[co, ci, h, u, v] = w[co, ci, g^-1 * h, g^-1 (u, v)]
    """
    planes = []
    for g in range(8):
        ginv = int(_D4_INV[g])
        perm = np.array([_D4_COMPOSE[ginv, h] for h in range(8)], dtype=np.int32)
        wg = w[:, :, perm, :, :]
        m, r = divmod(g, 4)
        if r:
            wg = jnp.rot90(wg, k=r, axes=(-2, -1))
        if m:
            wg = jnp.flip(wg, axis=-1)
        planes.append(wg)
    wt = jnp.stack(planes, axis=1)                       # (Co, 8, Ci, 8, k, k)
    Co, _, Ci, _, k, _ = wt.shape
    w_oihw = wt.reshape(Co * 8, Ci * 8, k, k)            # out = co*8+g, in = ci*8+h
    return jnp.transpose(w_oihw, (2, 3, 1, 0))           # HWIO


# ----------------------------------------------------------------------------
# Tile helpers (lane-dense: channels padded to 128 multiples, M padded to tm)
# ----------------------------------------------------------------------------
def _round_up(x, m):
    return -(-x // m) * m


def _channel_tile(c_pad, prefer_full_up_to=512):
    """Tile for a channel dim that is already a multiple of 128."""
    assert c_pad % 128 == 0
    if c_pad <= prefer_full_up_to:
        return c_pad
    for cand in (512, 256, 128):
        if c_pad % cand == 0:
            return cand
    return 128


def _shrink_tile(t, full):
    for cand in (512, 256, 128):
        if cand < t and full % cand == 0:
            return cand
    return 128


def _gemm_tiles(M, K_pad, N_pad, has_identity, out_itemsize):
    tn = _channel_tile(N_pad, 512)
    tk = _channel_tile(K_pad, 1024)      # full-K when it fits -> weights DMA'd once, VMEM-resident
    if M >= 16:
        # >= 2 M-blocks so the "parallel" axis can shard across both v7x TensorCores
        tm = min(256, _round_up((M + 1) // 2, 8))
    else:
        tm = _round_up(max(M, 1), 8)

    def vmem_bytes(tm_, tk_, tn_):
        b = 2 * tm_ * tk_ * 2            # x blocks, bf16, double-buffered
        b += 2 * tk_ * tn_ * 2           # w blocks
        b += 2 * tm_ * tn_ * out_itemsize
        if has_identity:
            b += 2 * tm_ * tn_ * 2       # bf16 residual blocks
        return b + tm_ * tn_ * 4         # f32 accumulator scratch

    while vmem_bytes(tm, tk, tn) > _VMEM_TILE_BUDGET:
        if tk > 128:
            tk = _shrink_tile(tk, K_pad)
        elif tn > 128:
            tn = _shrink_tile(tn, N_pad)
        elif tm > 8:
            tm = max(8, tm // 2)
        else:
            break
    return tm, tk, tn


# ----------------------------------------------------------------------------
# Tiled GEMM kernel (bf16 MXU, f32 VMEM accumulator, fused ReLU / residual add)
# used for the 1x1 group convs.
# ----------------------------------------------------------------------------
def _make_gemm_kernel(apply_relu, add_identity):
    def kernel(x_ref, w_ref, *rest):
        if add_identity:
            id_ref, o_ref, acc_ref = rest
        else:
            o_ref, acc_ref = rest

        kidx = pl.program_id(2)

        @pl.when(kidx == 0)
        def _():
            acc_ref[...] = jnp.zeros_like(acc_ref)

        acc_ref[...] += jnp.dot(x_ref[...], w_ref[...],
                                preferred_element_type=jnp.float32)

        @pl.when(kidx == pl.num_programs(2) - 1)
        def _():
            out = acc_ref[...]
            if add_identity:
                out = out + id_ref[...].astype(jnp.float32)
            if apply_relu:
                out = jnp.maximum(out, 0.0)
            o_ref[...] = out.astype(o_ref.dtype)

    return kernel


def tiled_gemm(x, w, *, relu=False, identity=None, out_dtype=jnp.bfloat16):
    """x: (M, K_pad) bf16, w: (K_pad, N_pad) bf16, identity: optional (M, N_pad) bf16."""
    M, K = x.shape
    K2, Npad = w.shape
    assert K == K2 and K % 128 == 0 and Npad % 128 == 0
    out_itemsize = jnp.dtype(out_dtype).itemsize
    tm, tk, tn = _gemm_tiles(M, K, Npad, identity is not None, out_itemsize)

    M_pad = _round_up(M, tm)
    if M_pad != M:   # zero rows contribute zeros and are sliced off -> no masking needed
        x = jnp.pad(x, ((0, M_pad - M), (0, 0)))
        if identity is not None:
            identity = jnp.pad(identity, ((0, M_pad - M), (0, 0)))

    in_specs = [
        pl.BlockSpec((tm, tk), lambda i, j, k: (i, k)),
        pl.BlockSpec((tk, tn), lambda i, j, k: (k, j)),
    ]
    args = [x, w]
    if identity is not None:
        in_specs.append(pl.BlockSpec((tm, tn), lambda i, j, k: (i, j)))
        args.append(identity)

    out = pl.pallas_call(
        _make_gemm_kernel(relu, identity is not None),
        out_shape=jax.ShapeDtypeStruct((M_pad, Npad), out_dtype),
        grid=(M_pad // tm, Npad // tn, K // tk),
        in_specs=in_specs,
        out_specs=pl.BlockSpec((tm, tn), lambda i, j, k: (i, j)),
        scratch_shapes=[pltpu.VMEM((tm, tn), jnp.float32)],
        compiler_params=pltpu.CompilerParams(
            dimension_semantics=("parallel", "parallel", "arbitrary"),
            vmem_limit_bytes=_VMEM_LIMIT),
    )(*args)
    return out[:M] if M_pad != M else out


def p4m_conv1x1(x_nhwc, w_mat, *, relu=False, identity=None, out_dtype=jnp.bfloat16):
    """1x1 group conv = GEMM over flattened pixels. x is bf16 with padded channels."""
    N, H, W, Kp = x_nhwc.shape
    Npad = w_mat.shape[1]
    xm = x_nhwc.reshape(N * H * W, Kp)
    idm = identity.reshape(N * H * W, Npad) if identity is not None else None
    y = tiled_gemm(xm, w_mat, relu=relu, identity=idm, out_dtype=out_dtype)
    return y.reshape(N, H, W, Npad)


# ----------------------------------------------------------------------------
# 3x3 group conv kernel with IMPLICIT im2col.
# The padded input is flattened spatially to (N, (H+3)*(W+2), Cin); for kernel tap
# (kh, kw) the contribution to output row r = h*Wp + w is input row r + kh*Wp + kw,
# so each tap is one row-shifted matmul accumulated into the f32 scratch.
# Rows with w >= W are junk and get sliced off in the wrapper.
# ----------------------------------------------------------------------------
def _make_conv3x3_kernel(H, Wp, relu):
    HWp = H * Wp

    def kernel(x_ref, w_ref, o_ref, acc_ref):
        kidx = pl.program_id(2)

        @pl.when(kidx == 0)
        def _():
            acc_ref[...] = jnp.zeros_like(acc_ref)

        for i in range(9):
            kh, kw = divmod(i, 3)
            off = kh * Wp + kw                       # static row shift
            xs = x_ref[0, off:off + HWp, :]          # (H*Wp, tk) bf16
            acc_ref[...] += jnp.dot(xs, w_ref[i],
                                    preferred_element_type=jnp.float32)

        @pl.when(kidx == pl.num_programs(2) - 1)
        def _():
            out = acc_ref[...]
            if relu:
                out = jnp.maximum(out, 0.0)
            o_ref[0, :, :] = out.astype(o_ref.dtype)

    return kernel


def p4m_conv3x3(x_nhwc, w9, *, stride=1, relu=True, out_dtype=jnp.bfloat16):
    """3x3 group conv (padding=1). x bf16 (N,H,W,Cin_pad); w9 bf16 (9, Cin_pad, Cout_pad)."""
    N, H, W, Cin_pad = x_nhwc.shape
    _, Cin_w, Cout_pad = w9.shape
    assert Cin_w == Cin_pad and Cin_pad % 128 == 0 and Cout_pad % 128 == 0

    Wp = W + 2
    # pad H by (1, 2): the extra bottom row keeps the last junk-row shift in bounds
    xp = jnp.pad(x_nhwc, ((0, 0), (1, 2), (1, 1), (0, 0)))
    rows_in = (H + 3) * Wp
    xp = xp.reshape(N, rows_in, Cin_pad)

    tk = _channel_tile(Cin_pad)
    tn = _channel_tile(Cout_pad)
    out_itemsize = jnp.dtype(out_dtype).itemsize

    def vmem_bytes(tk_, tn_):
        return (2 * rows_in * tk_ * 2 + 2 * 9 * tk_ * tn_ * 2
                + 2 * H * Wp * tn_ * out_itemsize + H * Wp * tn_ * 4)

    while vmem_bytes(tk, tn) > _VMEM_TILE_BUDGET:
        if tk > 128:
            tk = _shrink_tile(tk, Cin_pad)
        elif tn > 128:
            tn = _shrink_tile(tn, Cout_pad)
        else:
            break

    grid = (N, Cout_pad // tn, Cin_pad // tk)
    yflat = pl.pallas_call(
        _make_conv3x3_kernel(H, Wp, relu),
        out_shape=jax.ShapeDtypeStruct((N, H * Wp, Cout_pad), out_dtype),
        grid=grid,
        in_specs=[
            pl.BlockSpec((1, rows_in, tk), lambda n, j, k: (n, 0, k)),
            pl.BlockSpec((9, tk, tn), lambda n, j, k: (0, k, j)),
        ],
        out_specs=pl.BlockSpec((1, H * Wp, tn), lambda n, j, k: (n, 0, j)),
        scratch_shapes=[pltpu.VMEM((H * Wp, tn), jnp.float32)],
        compiler_params=pltpu.CompilerParams(
            dimension_semantics=("parallel", "parallel", "arbitrary"),
            vmem_limit_bytes=_VMEM_LIMIT),
    )(xp, w9)

    y = yflat.reshape(N, H, Wp, Cout_pad)[:, :, :W, :]
    if stride != 1:
        # TODO(synk): stride>1 computes the stride-1 conv and subsamples (downsample path unused)
        y = y[:, ::stride, ::stride, :]
    return y


# ----------------------------------------------------------------------------
# The block (bottleneck with p4m group convs, no batchnorm)
# ----------------------------------------------------------------------------
class Block:
    def __init__(self, key, in_planes, intermediate_planes,
                 identity_downsample=None, stride=1):
        self.expansion = 4
        k1, k2, k3 = jax.random.split(key, 3)

        def init_w(k, cout, cin, ks):
            fan_in = cin * 8 * ks * ks
            return (jax.random.normal(k, (cout, cin, 8, ks, ks), jnp.float32)
                    * (2.0 / fan_in) ** 0.5)

        self.w1 = init_w(k1, intermediate_planes, in_planes, 1)                    # conv1 1x1
        self.w2 = init_w(k2, intermediate_planes, intermediate_planes, 3)          # conv2 3x3
        self.w3 = init_w(k3, intermediate_planes * self.expansion,
                         intermediate_planes, 1)                                   # conv3 1x1
        self.stride = stride
        self.identity_downsample = identity_downsample
        # TODO(synk): identity_downsample path not implemented (this instance uses None)

        self.cin0 = in_planes * 8
        self.cmid = intermediate_planes * 8
        self.cout = intermediate_planes * self.expansion * 8
        self.cin0_pad = _round_up(self.cin0, 128)
        self.cmid_pad = _round_up(self.cmid, 128)
        self.cout_pad = _round_up(self.cout, 128)

        # p4m transform once (f32 HWIO kept for the reference)
        self.w1_hwio = p4m_transform_filter(self.w1)   # (1,1,cin0,cmid)
        self.w2_hwio = p4m_transform_filter(self.w2)   # (3,3,cmid,cmid)
        self.w3_hwio = p4m_transform_filter(self.w3)   # (1,1,cmid,cout)

        def pad_io(w_hwio, ci_pad, co_pad):
            kh, kw, ci, co = w_hwio.shape
            return jnp.pad(w_hwio, ((0, 0), (0, 0), (0, ci_pad - ci), (0, co_pad - co)))

        # cached channel-padded bf16 kernel operands (no per-call reshape/cast)
        self.w1_mat = pad_io(self.w1_hwio, self.cin0_pad, self.cmid_pad
                             ).reshape(self.cin0_pad, self.cmid_pad).astype(jnp.bfloat16)
        self.w2_p4m = pad_io(self.w2_hwio, self.cmid_pad, self.cmid_pad
                             ).reshape(9, self.cmid_pad, self.cmid_pad).astype(jnp.bfloat16)
        self.w3_mat = pad_io(self.w3_hwio, self.cmid_pad, self.cout_pad
                             ).reshape(self.cmid_pad, self.cout_pad).astype(jnp.bfloat16)

    def __call__(self, x_ncghw):
        N, C, G, H, W = x_ncghw.shape
        assert G == 8 and C * 8 == self.cin0
        # NCGHW -> N,H,W,(C*8); cast to bf16 and pad channels to a lane-dense multiple of 128.
        # (In a full network these transposes would live at model entry/exit only.)
        x = jnp.transpose(x_ncghw, (0, 3, 4, 1, 2)).reshape(N, H, W, self.cin0)
        x = x.astype(jnp.bfloat16)
        if self.cin0_pad != self.cin0:
            x = jnp.pad(x, ((0, 0), (0, 0), (0, 0), (0, self.cin0_pad - self.cin0)))
        identity = x    # bf16, channel-padded; fused into conv3's epilogue

        x = p4m_conv1x1(x, self.w1_mat, relu=True, out_dtype=jnp.bfloat16)          # conv1 + relu
        x = p4m_conv3x3(x, self.w2_p4m, stride=self.stride, relu=True,
                        out_dtype=jnp.bfloat16)                                      # conv2 + relu

        if self.identity_downsample is not None:
            raise NotImplementedError("identity_downsample not implemented")  # TODO(synk)
        assert x.shape[1:3] == identity.shape[1:3] and \
            self.cout == self.cin0 and self.cout_pad == self.cin0_pad, \
            "residual shape mismatch (identity_downsample would be required)"

        # conv3 (1x1) with fused residual add + relu inside the kernel, f32 output
        y = p4m_conv1x1(x, self.w3_mat, relu=True, identity=identity,
                        out_dtype=jnp.float32)

        H2, W2 = y.shape[1], y.shape[2]
        y = y[..., : self.cout]
        return y.reshape(N, H2, W2, self.cout // 8, 8).transpose(0, 3, 4, 1, 2)     # back to NCGHW


# ----------------------------------------------------------------------------
# Pure-JAX reference (lax.conv with the same bf16-stream / f32-acc numerics)
# ----------------------------------------------------------------------------
def ref_block(x_ncghw, blk):
    N, C, G, H, W = x_ncghw.shape
    x = jnp.transpose(x_ncghw, (0, 3, 4, 1, 2)).reshape(N, H, W, C * 8)
    identity = x.astype(jnp.bfloat16)

    def conv(xx, w, stride, pad):
        return jax.lax.conv_general_dilated(
            xx.astype(jnp.bfloat16), w.astype(jnp.bfloat16),
            (stride, stride), [(pad, pad), (pad, pad)],
            dimension_numbers=("NHWC", "HWIO", "NHWC"),
            preferred_element_type=jnp.float32)

    x = jax.nn.relu(conv(x, blk.w1_hwio, 1, 0)).astype(jnp.bfloat16)
    x = jax.nn.relu(conv(x, blk.w2_hwio, blk.stride, 1)).astype(jnp.bfloat16)
    x = conv(x, blk.w3_hwio, 1, 0)
    x = jax.nn.relu(x + identity.astype(jnp.float32))
    Cout = x.shape[-1] // 8
    return x.reshape(N, x.shape[1], x.shape[2], Cout, 8).transpose(0, 3, 4, 1, 2)


if __name__ == "__main__":
    key = jax.random.PRNGKey(0)
    kx, kp = jax.random.split(key)

    N = 2
    intermediate = 2
    in_planes = intermediate * 4      # so the residual add works without a downsample
    H = W = 8

    x = jax.random.normal(kx, (N, in_planes, 8, H, W), jnp.float32)
    blk = Block(kp, in_planes, intermediate, identity_downsample=None, stride=1)

    y = jax.block_until_ready(blk(x))
    assert y.shape == (N, intermediate * 4, 8, H, W), y.shape

    y_ref = jax.block_until_ready(ref_block(x, blk))
    err = float(jnp.max(jnp.abs(y - y_ref)))
    assert jnp.allclose(y, y_ref, atol=3e-2, rtol=3e-2), err

    print("KERNEL_OK")
</pallas_src>

<mosaic_0001>
module attributes {stable_mosaic.version = 11 : i64} {
  func.func @kernel(%arg0: i32, %arg1: i32, %arg2: i32, %arg3: memref<64x128xbf16, #tpu.memory_space<vmem>>, %arg4: memref<128x128xbf16, #tpu.memory_space<vmem>>, %arg5: memref<64x128xbf16, #tpu.memory_space<vmem>>, %arg6: memref<64x128xf32, #tpu.memory_space<vmem>>) attributes {dimension_semantics = [#tpu.dimension_semantics<parallel>, #tpu.dimension_semantics<parallel>, #tpu.dimension_semantics<arbitrary>], iteration_bounds = array<i64: 2, 1, 1>, scalar_prefetch = 0 : i64, scratch_operands = 1 : i64, tpu.core_type = #tpu.core_type<tc>, window_params = [{transform_indices = @transform_0, window_bounds = array<i64: 64, 128>}, {transform_indices = @transform_1, window_bounds = array<i64: 128, 128>}, {transform_indices = @transform_2, window_bounds = array<i64: 64, 128>}]} {
    %c0_i32 = arith.constant 0 : i32
    %0 = arith.cmpi eq, %arg2, %c0_i32 : i32
    %1 = arith.extui %0 : i1 to i32
    %c0_i32_0 = arith.constant 0 : i32
    %2 = arith.cmpi ne, %1, %c0_i32_0 : i32
    scf.if %2 {
      %cst_10 = arith.constant 0.000000e+00 : f32
      %12 = vector.broadcast %cst_10 : f32 to vector<64x128xf32>
      %c0_11 = arith.constant 0 : index
      %c0_12 = arith.constant 0 : index
      %13 = vector.load %arg6[%c0_11, %c0_12] : memref<64x128xf32, #tpu.memory_space<vmem>>, vector<64x128xf32>
      tpu.vector_store %arg6[%c0_11, %c0_12], %12 {strides = array<i32>} : memref<64x128xf32, #tpu.memory_space<vmem>>, vector<64x128xf32>,
    } else {
    }
    %c0 = arith.constant 0 : index
    %c0_1 = arith.constant 0 : index
    %3 = vector.load %arg6[%c0, %c0_1] : memref<64x128xf32, #tpu.memory_space<vmem>>, vector<64x128xf32>
    %c0_2 = arith.constant 0 : index
    %c0_3 = arith.constant 0 : index
    %4 = vector.load %arg3[%c0_2, %c0_3] : memref<64x128xbf16, #tpu.memory_space<vmem>>, vector<64x128xbf16>
    %c0_4 = arith.constant 0 : index
    %c0_5 = arith.constant 0 : index
    %5 = vector.load %arg4[%c0_4, %c0_5] : memref<128x128xbf16, #tpu.memory_space<vmem>>, vector<128x128xbf16>
    %cst = arith.constant dense<0.000000e+00> : vector<64x128xf32>
    %6 = tpu.matmul %4, %5, %cst {dimension_numbers = #tpu.dot_dimension_numbers<[1], [0], [0], [1], [0, 0, 1, 1], [], []>} : vector<64x128xbf16>, vector<128x128xbf16>, vector<64x128xf32> -> vector<64x128xf32>
    %7 = arith.addf %3, %6 : vector<64x128xf32>
    %c0_6 = arith.constant 0 : index
    %c0_7 = arith.constant 0 : index
    %8 = vector.load %arg6[%c0_6, %c0_7] : memref<64x128xf32, #tpu.memory_space<vmem>>, vector<64x128xf32>
    tpu.vector_store %arg6[%c0_6, %c0_7], %7 {strides = array<i32>} : memref<64x128xf32, #tpu.memory_space<vmem>>, vector<64x128xf32>,
    %c0_i32_8 = arith.constant 0 : i32
    %9 = arith.cmpi eq, %arg2, %c0_i32_8 : i32
    %10 = arith.extui %9 : i1 to i32
    %c0_i32_9 = arith.constant 0 : i32
    %11 = arith.cmpi ne, %10, %c0_i32_9 : i32
    scf.if %11 {
      %c0_10 = arith.constant 0 : index
      %c0_11 = arith.constant 0 : index
      %12 = vector.load %arg6[%c0_10, %c0_11] : memref<64x128xf32, #tpu.memory_space<vmem>>, vector<64x128xf32>
      %cst_12 = arith.constant 0.000000e+00 : f32
      %13 = vector.broadcast %cst_12 : f32 to vector<64x128xf32>
      %14 = arith.maximumf %12, %13 : vector<64x128xf32>
      %15 = arith.truncf %14 : vector<64x128xf32> to vector<64x128xbf16>
      %c0_13 = arith.constant 0 : index
      %c0_14 = arith.constant 0 : index
      %16 = vector.load %arg5[%c0_13, %c0_14] : memref<64x128xbf16, #tpu.memory_space<vmem>>, vector<64x128xbf16>
      tpu.vector_store %arg5[%c0_13, %c0_14], %15 {strides = array<i32>} : memref<64x128xbf16, #tpu.memory_space<vmem>>, vector<64x128xbf16>,
    } else {
    }
    return
  }
  func.func @transform_0(%arg0: i32, %arg1: i32, %arg2: i32) -> (i32, i32) {
    %c0_i32 = arith.constant 0 : i32
    return %arg0, %arg2 : i32, i32
  }
  func.func @transform_1(%arg0: i32, %arg1: i32, %arg2: i32) -> (i32, i32) {
    %c0_i32 = arith.constant 0 : i32
    return %arg2, %arg1 : i32, i32
  }
  func.func @transform_2(%arg0: i32, %arg1: i32, %arg2: i32) -> (i32, i32) {
    %c0_i32 = arith.constant 0 : i32
    return %arg0, %arg1 : i32, i32
  }
}

</mosaic_0001>

<llo_original>
// kernel: tpu_custom_call.1
$region0: #{tpu_custom_call.1}
  #allocation0 [shape = 'u32[]', space=smem, size = 0x4, offset = 0x4, fixed_abs, tag = 'smem constant byte address 0x4 - core index']
  #allocation1 [shape = 'u32[72,128]{1,0:T(1,128)}', space=vmem, size = 0x9000, scoped, tag = 'internal scratch']
  #allocation2 [shape = 'f32[64,128]{1,0:T(8,128)}', space=vmem, size = 0x8000, scoped, tag = 'scratch operand']
  %s0 = inlined_call_operand.hbm [shape: bf16[128,128], index: 0, kind: input, shape index: {}]
  %s1 = inlined_call_operand.hbm [shape: bf16[128,128], index: 1, kind: input, shape index: {}]
  %s2 = inlined_call_operand.hbm [shape: bf16[128,128], index: 2, kind: output, shape index: {}]
  %s3 = sld [smem:[#allocation0]]
  $region57: #{tpu_custom_call.1} parent=0
    _
  %s5 = ssub.s32 1, %s3
  %s6 = scalar_select 0, %s5, %s3
  $region1: #{tpu_custom_call.1} parent=0
    #allocation3 [shape = 'u8[32768]{0}', space=vmem, size = 0x8000, scoped, tag = 'input window, operand 0']
    #allocation4 [shape = 's32[2]{0}', space=sflag, size = 0x8, scoped, tag = 'scoped memory for tpu_custom_call.1']
    #allocation5 [shape = 's32[2]{0}', space=sflag, size = 0x8, scoped, tag = 'scoped memory for tpu_custom_call.1']
    #allocation6 [shape = 'u8[32768]{0}', space=vmem, size = 0x8000, scoped, tag = 'input window, operand 1, single buffered']
    #allocation7 [shape = 's32[1]{0}', space=sflag, size = 0x4, scoped, tag = 'scoped memory for tpu_custom_call.1']
    #allocation8 [shape = 'u8[32768]{0}', space=vmem, size = 0x8000, scoped, tag = 'output window, operand 0']
    %7 = vsyncpa [#allocation4], 0
    %s8 = scalar_lea.sflag [#allocation4], 1
    %9 = vsyncpa %s8, 0
    %10 = vsyncpa [#allocation7], 0
    %11 = vsyncpa [#allocation5], 0
    %s12 = scalar_lea.sflag [#allocation5], 1
    %13 = vsyncpa %s12, 0
    loop: start=0, step=1, limit=4
    $region2: #{tpu_custom_call.1} parent=1 // loop_pre_header
      _
    $region3: #{tpu_custom_call.1} parent=1 // loop_header
      %s15 = sphi 0, %s19
      %p16 = scmp.ge.s32.totalorder %s15, 4
      %s22 = sphi 0, %s41
      %s23 = sphi 0, %s37
      %s24 = sphi 0, %s33
      %s25 = sphi 0, %s22
      %s26 = sphi 0, %s23
      %s27 = sphi 0, %s24
      %s28 = sphi 0, %s25
      %s29 = sphi 0, %s26
      %s30 = sphi 0, %s27
      %s46 = sphi 0, %s48
      %s49 = sphi 0, %s46
      %s50 = sphi 0, %s49
      %s66 = sphi 0, %s50
      %s74 = sphi 0, %s76
      %s77 = sphi 0, %s74
      %s78 = sphi 0, %s77
      %s94 = sphi 0, %s78
      %s102 = sphi 0, %s104
      %s105 = sphi 0, %s102
      %s106 = sphi 0, %s105
      %s122 = sphi 0, %s106
    $region4: #{tpu_custom_call.1} parent=1 // loop_header_branch
      %18 = sbr.rel (%p16) target = $region8
    $region5: #{tpu_custom_call.1} parent=1 // loop_body
      %s20 = ssub.s32 %s15, 1
      %s21 = ssub.s32 %s15, 2
      %s31 = sadd.s32 1, %s24
      %p32 = scmp.ge.s32.totalorder %s31, 1
      %s33 = scalar_select %p32, 0, %s31
      %s34 = sadd.s32 1, %s23
      %s35 = scalar_select %p32, %s34, %s23
      %p36 = scmp.ge.s32.totalorder %s35, 1
      %s37 = scalar_select %p36, 0, %s35
      %s38 = sadd.s32 1, %s22
      %s39 = scalar_select %p36, %s38, %s22
      %p40 = scmp.ge.s32.totalorder %s39, 2
      %s41 = scalar_select %p40, 0, %s39
      %s42 = ssub.s32 %s22, %s41
      %s43 = ssub.s32 %s24, %s33
      %s44 = sor.u32 %s42, %s43
      %p45 = scmp.eq.s32.totalorder %s44, 0
      %s47 = sadd.s32 %s46, 1
      %s48 = scalar_select %p45, %s46, %s47
      %p51 = pneg %p45
      %p52 = scmp.eq.s32.totalorder %s15, 1
      %p53 = por %p51, %p52
      %p54 = scmp.ne.s32.totalorder %s46, %s49
      %p55 = scmp.eq.s32.totalorder %s15, 0
      %p56 = por %p54, %p55
      %p57 = scmp.ne.s32.totalorder %s46, %s49
      %p58 = scmp.eq.s32.totalorder %s20, 1
      %p59 = por %p57, %p58
      %p60 = scmp.ne.s32.totalorder %s49, %s50
      %p61 = scmp.eq.s32.totalorder %s20, 0
      %p62 = por %p60, %p61
      %p63 = scmp.ne.s32.totalorder %s49, %s50
      %p64 = scmp.eq.s32.totalorder %s21, 1
      %p65 = por %p63, %p64
      %p67 = scmp.ne.s32.totalorder %s50, %s66
      %p68 = scmp.eq.s32.totalorder %s21, 0
      %p69 = por %p67, %p68
      %s70 = ssub.s32 %s24, %s33
      %s71 = ssub.s32 %s23, %s37
      %s72 = sor.u32 %s70, %s71
      %p73 = scmp.eq.s32.totalorder %s72, 0
      %s75 = sadd.s32 %s74, 1
      %s76 = scalar_select %p73, %s74, %s75
      %p79 = pneg %p73
      %p80 = scmp.eq.s32.totalorder %s15, 1
      %p81 = por %p79, %p80
      %p82 = scmp.ne.s32.totalorder %s74, %s77
      %p83 = scmp.eq.s32.totalorder %s15, 0
      %p84 = por %p82, %p83
      %p85 = scmp.ne.s32.totalorder %s74, %s77
      %p86 = scmp.eq.s32.totalorder %s20, 1
      %p87 = por %p85, %p86
      %p88 = scmp.ne.s32.totalorder %s77, %s78
      %p89 = scmp.eq.s32.totalorder %s20, 0
      %p90 = por %p88, %p89
      %p91 = scmp.ne.s32.totalorder %s77, %s78
      %p92 = scmp.eq.s32.totalorder %s21, 1
      %p93 = por %p91, %p92
      %p95 = scmp.ne.s32.totalorder %s78, %s94
      %p96 = scmp.eq.s32.totalorder %s21, 0
      %p97 = por %p95, %p96
      %s98 = ssub.s32 %s22, %s41
      %s99 = ssub.s32 %s23, %s37
      %s100 = sor.u32 %s98, %s99
      %p101 = scmp.eq.s32.totalorder %s100, 0
      %s103 = sadd.s32 %s102, 1
      %s104 = scalar_select %p101, %s102, %s103
      %p107 = pneg %p101
      %p108 = scmp.eq.s32.totalorder %s15, 1
      %p109 = por %p107, %p108
      %p110 = scmp.ne.s32.totalorder %s102, %s105
      %p111 = scmp.eq.s32.totalorder %s15, 0
      %p112 = por %p110, %p111
      %p113 = scmp.ne.s32.totalorder %s102, %s105
      %p114 = scmp.eq.s32.totalorder %s20, 1
      %p115 = por %p113, %p114
      %p116 = scmp.ne.s32.totalorder %s105, %s106
      %p117 = scmp.eq.s32.totalorder %s20, 0
      %p118 = por %p116, %p117
      %p119 = scmp.ne.s32.totalorder %s105, %s106
      %p120 = scmp.eq.s32.totalorder %s21, 1
      %p121 = por %p119, %p120
      %p123 = scmp.ne.s32.totalorder %s106, %s122
      %p124 = scmp.eq.s32.totalorder %s21, 0
      %p125 = por %p123, %p124
      %p126 = scmp.le.s32.totalorder 1, %s15
      %p127 = scmp.lt.s32.totalorder %s15, 3
      %p128 = pnand %p126, %p127
      %p129 = pneg %p128
      // Predicated region
      $region9: #{tpu_custom_call.1} parent=5 // pred_check
        _
      $region10: #{tpu_custom_call.1} parent=5 // pred_check_branch
        %131 = sbr.rel (%p128) target = $region12
      $region11: #{tpu_custom_call.1} parent=5 // pred_region
        %s132 = ssub.s32 %s15, 1
        // Predicated region
        $region13: #{tpu_custom_call.1} parent=11 // pred_check
          %p133 = pneg %p90
        $region14: #{tpu_custom_call.1} parent=11 // pred_check_branch
          %135 = sbr.rel (%p133) target = $region16
        $region15: #{tpu_custom_call.1} parent=11 // pred_region
          %s136 = smul.u32 16, %s27
          %138 = vsyncadd [#allocation7], 0
          %s139 = sadd.s32 %s26, %s136
          %s140 = smul.addr %s139, 4
          %s141 = scalar_lea.hbm %s1, %s140
          %s142 = sshll.u32 %s141, 4
          %s143 = int_to_ptr.hbm [resolvable:$true] %s142
          %s144 = sshll.u32 [#allocation6], 4
          %s145 = int_to_ptr.vmem [resolvable:$true] %s144
          %150 = dma.hbm_to_vmem [thread:$0]  %s143, 1024, %s145, [#allocation7], 64, 64, 4
        $region16: #{tpu_custom_call.1} parent=11 // pred_fallthru
          _
      $region12: #{tpu_custom_call.1} parent=5 // pred_fallthru
        _
      %p151 = scmp.lt.s32.totalorder %s15, 2
      // Predicated region
      $region17: #{tpu_custom_call.1} parent=5 // pred_check
        %p152 = pneg %p151
      $region18: #{tpu_custom_call.1} parent=5 // pred_check_branch
        %154 = sbr.rel (%p152) target = $region20
      $region19: #{tpu_custom_call.1} parent=5 // pred_region
        // Predicated region
        $region21: #{tpu_custom_call.1} parent=19 // pred_check
          %p155 = pneg %p56
        $region22: #{tpu_custom_call.1} parent=19 // pred_check_branch
          %157 = sbr.rel (%p155) target = $region24
        $region23: #{tpu_custom_call.1} parent=19 // pred_region
          %s158 = sand.u32 %s46, 1
          %s159 = scalar_lea.sflag [#allocation4], %s158
          %s160 = sand.u32 %s46, 1
          %s161 = smul.addr %s160, 32
          %s162 = scalar_lea.vmem [#allocation3], %s161
          %s163 = smul.u32 8, %s22
          %165 = vsyncadd %s159, 0
          %s166 = sadd.s32 %s24, %s163
          %s167 = smul.addr %s166, 4
          %s168 = scalar_lea.hbm %s0, %s167
          %s169 = sshll.u32 %s168, 4
          %s170 = int_to_ptr.hbm [resolvable:$true] %s169
          %s171 = sshll.u32 %s162, 4
          %s172 = int_to_ptr.vmem [resolvable:$true] %s171
          %177 = dma.hbm_to_vmem [thread:$0]  %s170, 512, %s172, %s159, 64, 64, 4
        $region24: #{tpu_custom_call.1} parent=19 // pred_fallthru
          _
      $region20: #{tpu_custom_call.1} parent=5 // pred_fallthru
        _
      %p178 = scmp.le.s32.totalorder 1, %s15
      %p179 = scmp.lt.s32.totalorder %s15, 3
      %p180 = pnand %p178, %p179
      %p181 = pneg %p180
      // Predicated region
      $region25: #{tpu_custom_call.1} parent=5 // pred_check
        _
      $region26: #{tpu_custom_call.1} parent=5 // pred_check_branch
        %183 = sbr.rel (%p180) target = $region28
      $region27: #{tpu_custom_call.1} parent=5 // pred_region
        %s184 = ssub.s32 %s15, 1
        %s185 = sand.u32 %s49, 1
        %s186 = scalar_lea.sflag [#allocation4], %s185
        %s187 = sand.u32 %s49, 1
        %s188 = smul.addr %s187, 32
        %s189 = scalar_lea.vmem [#allocation3], %s188
        // Predicated region
        $region29: #{tpu_custom_call.1} parent=27 // pred_check
          %p190 = pneg %p62
        $region30: #{tpu_custom_call.1} parent=27 // pred_check_branch
          %192 = sbr.rel (%p190) target = $region32
        $region31: #{tpu_custom_call.1} parent=27 // pred_region
          %194 = dma.done %s186, 512
        $region32: #{tpu_custom_call.1} parent=27 // pred_fallthru
          _
        // Predicated region
        $region33: #{tpu_custom_call.1} parent=27 // pred_check
          %p195 = pneg %p90
        $region34: #{tpu_custom_call.1} parent=27 // pred_check_branch
          %197 = sbr.rel (%p195) target = $region36
        $region35: #{tpu_custom_call.1} parent=27 // pred_region
          %199 = dma.done [#allocation7], 1024
        $region36: #{tpu_custom_call.1} parent=27 // pred_fallthru
          _
        %s200 = sand.u32 %s49, 1
        %s201 = scalar_lea.sflag [#allocation4], %s200
        %s202 = sand.u32 %s49, 1
        %s203 = smul.addr %s202, 32
        %s204 = scalar_lea.vmem [#allocation3], %s203
        %p205 = pneg %p62
        %p206 = pneg %p59
        %p207 = pneg %p90
        %p208 = pneg %p87
        %p209 = pneg %p118
        %p210 = pneg %p115
        %s211 = sand.u32 %s105, 1
        %s212 = scalar_lea.sflag [#allocation5], %s211
        %s213 = sand.u32 %s105, 1
        %s214 = smul.addr %s213, 32
        %s215 = scalar_lea.vmem [#allocation8], %s214
        %s216 = smul.u32 8, %s25
        %s217 = smul.u32 16, %s27
        %s218 = smul.u32 8, %s25
        %p219 = scmp.eq.s32.totalorder %s27, 0
        // Predicated region
        $region37: #{tpu_custom_call.1} parent=27 // pred_check
          %p220 = pneg %p219
        $region38: #{tpu_custom_call.1} parent=27 // pred_check_branch
          %222 = sbr.rel (%p220) target = $region40
        $region39: #{tpu_custom_call.1} parent=27 // pred_region
          %223 = vst [vmem:[#allocation2] sm:$0xff] 0.0
          %224 = vst [vmem:[#allocation2 + $0x8] sm:$0xff] 0.0
          %225 = vst [vmem:[#allocation2 + $0x10] sm:$0xff] 0.0
          %226 = vst [vmem:[#allocation2 + $0x18] sm:$0xff] 0.0
          %227 = vst [vmem:[#allocation2 + $0x20] sm:$0xff] 0.0
          %228 = vst [vmem:[#allocation2 + $0x28] sm:$0xff] 0.0
          %229 = vst [vmem:[#allocation2 + $0x30] sm:$0xff] 0.0
          %230 = vst [vmem:[#allocation2 + $0x38] sm:$0xff] 0.0
        $region40: #{tpu_custom_call.1} parent=27 // pred_fallthru
          _
        %v231 = vld [vmem:[#allocation2] sm:$0xff]
        %v232 = vld [vmem:[#allocation2 + $0x8] sm:$0xff]
        %v233 = vld [vmem:[#allocation2 + $0x10] sm:$0xff]
        %v234 = vld [vmem:[#allocation2 + $0x18] sm:$0xff]
        %v235 = vld [vmem:[#allocation2 + $0x20] sm:$0xff]
        %v236 = vld [vmem:[#allocation2 + $0x28] sm:$0xff]
        %v237 = vld [vmem:[#allocation2 + $0x30] sm:$0xff]
        %v238 = vld [vmem:[#allocation2 + $0x38] sm:$0xff]
        %v239 = vld [vmem:[%s189] sm:$0xf]
        %v240 = vld [vmem:[%s189 + $0x4] sm:$0xf]
        %v241 = vld [vmem:[%s189 + $0x8] sm:$0xf]
        %v242 = vld [vmem:[%s189 + $0xc] sm:$0xf]
        %v243 = vld [vmem:[%s189 + $0x10] sm:$0xf]
        %v244 = vld [vmem:[%s189 + $0x14] sm:$0xf]
        %v245 = vld [vmem:[%s189 + $0x18] sm:$0xf]
        %v246 = vld [vmem:[%s189 + $0x1c] sm:$0xf]
        %v247 = vld [vmem:[#allocation6] sm:$0xf]
        %v248 = vld [vmem:[#allocation6 + $0x4] sm:$0xf]
        %v249 = vld [vmem:[#allocation6 + $0x8] sm:$0xf]
        %v250 = vld [vmem:[#allocation6 + $0xc] sm:$0xf]
        %v251 = vld [vmem:[#allocation6 + $0x10] sm:$0xf]
        %v252 = vld [vmem:[#allocation6 + $0x14] sm:$0xf]
        %v253 = vld [vmem:[#allocation6 + $0x18] sm:$0xf]
        %v254 = vld [vmem:[#allocation6 + $0x1c] sm:$0xf]
        %v255 = vld [vmem:[#allocation6 + $0x20] sm:$0xf]
        %v256 = vld [vmem:[#allocation6 + $0x24] sm:$0xf]
        %v257 = vld [vmem:[#allocation6 + $0x28] sm:$0xf]
        %v258 = vld [vmem:[#allocation6 + $0x2c] sm:$0xf]
        %v259 = vld [vmem:[#allocation6 + $0x30] sm:$0xf]
        %v260 = vld [vmem:[#allocation6 + $0x34] sm:$0xf]
        %v261 = vld [vmem:[#allocation6 + $0x38] sm:$0xf]
        %v262 = vld [vmem:[#allocation6 + $0x3c] sm:$0xf]
        %v271 = vunpack.c.l.b16 %v239
        %v272 = vunpack.c.l.b16 %v240
        %v273 = vunpack.c.l.b16 %v241
        %v274 = vunpack.c.l.b16 %v242
        %v275 = vunpack.c.l.b16 %v243
        %v276 = vunpack.c.l.b16 %v244
        %v277 = vunpack.c.l.b16 %v245
        %v278 = vunpack.c.l.b16 %v246
        %v279 = vpack.c.b16 %v272, %v271
        %v280 = vpack.c.b16 %v274, %v273
        %v281 = vpack.c.b16 %v276, %v275
        %v282 = vpack.c.b16 %v278, %v277
        %v303 = vunpack.c.l.b16 %v247
        %v304 = vunpack.c.l.b16 %v248
        %v305 = vunpack.c.l.b16 %v249
        %v306 = vunpack.c.l.b16 %v250
        %v307 = vunpack.c.l.b16 %v251
        %v308 = vunpack.c.l.b16 %v252
        %v309 = vunpack.c.l.b16 %v253
        %v310 = vunpack.c.l.b16 %v254
        %v311 = vunpack.c.l.b16 %v255
        %v312 = vunpack.c.l.b16 %v256
        %v313 = vunpack.c.l.b16 %v257
        %v314 = vunpack.c.l.b16 %v258
        %v315 = vunpack.c.l.b16 %v259
        %v316 = vunpack.c.l.b16 %v260
        %v317 = vunpack.c.l.b16 %v261
        %v318 = vunpack.c.l.b16 %v262
        %v319 = vpack.c.b16 %v304, %v303
        %v320 = vpack.c.b16 %v306, %v305
        %v321 = vpack.c.b16 %v308, %v307
        %v322 = vpack.c.b16 %v310, %v309
        %v323 = vpack.c.b16 %v312, %v311
        %v324 = vpack.c.b16 %v314, %v313
        %v325 = vpack.c.b16 %v316, %v315
        %v326 = vpack.c.b16 %v318, %v317
        %335 = vmatpush.bf16.msra.mxu0 %v326
        %336 = vmatpush.bf16.msra.mxu0 %v325
        %337 = vmatpush.bf16.msra.mxu0 %v324
        %338 = vmatpush.bf16.msra.mxu0 %v323
        %339 = vmatpush.bf16.msra.mxu0 %v322
        %340 = vmatpush.bf16.msra.mxu0 %v321
        %341 = vmatpush.bf16.msra.mxu0 %v320
        %342 = vmatpush.bf16.msra.mxu0 %v319
        %343 = vmatmul.bf16.gmra.mxu0 %v279
        %v344 = vpop.f32.mrf.mxu0
        %v345 = vadd.f32 0.0, %v344
        %v346 = vpop.f32.mrf.mxu0
        %v347 = vadd.f32 0.0, %v346
        %348 = vmatmul.bf16.gmra.mxu0 %v280
        %v349 = vpop.f32.mrf.mxu0
        %v350 = vadd.f32 0.0, %v349
        %v351 = vpop.f32.mrf.mxu0
        %v352 = vadd.f32 0.0, %v351
        %353 = vmatmul.bf16.gmra.mxu0 %v281
        %v354 = vpop.f32.mrf.mxu0
        %v355 = vadd.f32 0.0, %v354
        %v356 = vpop.f32.mrf.mxu0
        %v357 = vadd.f32 0.0, %v356
        %358 = vmatmul.bf16.gmra.mxu0 %v282
        %v359 = vpop.f32.mrf.mxu0
        %v360 = vadd.f32 0.0, %v359
        %v361 = vpop.f32.mrf.mxu0
        %v362 = vadd.f32 0.0, %v361
        %363 = vdwg.mxu0
        %v364 = vadd.f32 %v231, %v345
        %v365 = vadd.f32 %v232, %v347
        %v366 = vadd.f32 %v233, %v350
        %v367 = vadd.f32 %v234, %v352
        %v368 = vadd.f32 %v235, %v355
        %v369 = vadd.f32 %v236, %v357
        %v370 = vadd.f32 %v237, %v360
        %v371 = vadd.f32 %v238, %v362
        %372 = vst [vmem:[#allocation2] sm:$0xff] %v364
        %373 = vst [vmem:[#allocation2 + $0x8] sm:$0xff] %v365
        %374 = vst [vmem:[#allocation2 + $0x10] sm:$0xff] %v366
        %375 = vst [vmem:[#allocation2 + $0x18] sm:$0xff] %v367
        %376 = vst [vmem:[#allocation2 + $0x20] sm:$0xff] %v368
        %377 = vst [vmem:[#allocation2 + $0x28] sm:$0xff] %v369
        %378 = vst [vmem:[#allocation2 + $0x30] sm:$0xff] %v370
        %379 = vst [vmem:[#allocation2 + $0x38] sm:$0xff] %v371
        // Predicated region
        $region41: #{tpu_custom_call.1} parent=27 // pred_check
          %p380 = pneg %p219
        $region42: #{tpu_custom_call.1} parent=27 // pred_check_branch
          %382 = sbr.rel (%p380) target = $region44
        $region43: #{tpu_custom_call.1} parent=27 // pred_region
          %v383 = vld [vmem:[#allocation2] sm:$0xff]
          %v384 = vld [vmem:[#allocation2 + $0x8] sm:$0xff]
          %v385 = vld [vmem:[#allocation2 + $0x10] sm:$0xff]
          %v386 = vld [vmem:[#allocation2 + $0x18] sm:$0xff]
          %v387 = vld [vmem:[#allocation2 + $0x20] sm:$0xff]
          %v388 = vld [vmem:[#allocation2 + $0x28] sm:$0xff]
          %v389 = vld [vmem:[#allocation2 + $0x30] sm:$0xff]
          %v390 = vld [vmem:[#allocation2 + $0x38] sm:$0xff]
          %v391 = vmax.f32 %v383, 0.0
          %v392 = vmax.f32 %v384, 0.0
          %v393 = vmax.f32 %v385, 0.0
          %v394 = vmax.f32 %v386, 0.0
          %v395 = vmax.f32 %v387, 0.0
          %v396 = vmax.f32 %v388, 0.0
          %v397 = vmax.f32 %v389, 0.0
          %v398 = vmax.f32 %v390, 0.0
          %v399 = vpack.c.bf16 %v391, %v391
          %v400 = vpack.c.bf16 %v392, %v392
          %v401 = vpack.c.bf16 %v393, %v393
          %v402 = vpack.c.bf16 %v394, %v394
          %v403 = vpack.c.bf16 %v395, %v395
          %v404 = vpack.c.bf16 %v396, %v396
          %v405 = vpack.c.bf16 %v397, %v397
          %v406 = vpack.c.bf16 %v398, %v398
          %407 = vst [vmem:[%s215] sm:$0xf] %v399
          %408 = vst [vmem:[%s215 + $0x4] sm:$0xf] %v400
          %409 = vst [vmem:[%s215 + $0x8] sm:$0xf] %v401
          %410 = vst [vmem:[%s215 + $0xc] sm:$0xf] %v402
          %411 = vst [vmem:[%s215 + $0x10] sm:$0xf] %v403
          %412 = vst [vmem:[%s215 + $0x14] sm:$0xf] %v404
          %413 = vst [vmem:[%s215 + $0x18] sm:$0xf] %v405
          %414 = vst [vmem:[%s215 + $0x1c] sm:$0xf] %v406
        $region44: #{tpu_custom_call.1} parent=27 // pred_fallthru
          _
        %s415 = sand.u32 %s105, 1
        %s416 = scalar_lea.sflag [#allocation5], %s415
        %s417 = sand.u32 %s105, 1
        %s418 = smul.addr %s417, 32
        %s419 = scalar_lea.vmem [#allocation8], %s418
        // Predicated region
        $region45: #{tpu_custom_call.1} parent=27 // pred_check
          %p420 = pneg %p115
        $region46: #{tpu_custom_call.1} parent=27 // pred_check_branch
          %422 = sbr.rel (%p420) target = $region48
        $region47: #{tpu_custom_call.1} parent=27 // pred_region
          %s423 = smul.u32 8, %s25
          %425 = vsyncadd %s416, 0
          %s426 = sadd.s32 %s26, %s423
          %s427 = smul.addr %s426, 4
          %s428 = scalar_lea.hbm %s2, %s427
          %s429 = sshll.u32 %s419, 4
          %s430 = int_to_ptr.vmem [resolvable:$true] %s429
          %s431 = sshll.u32 %s428, 4
          %s432 = int_to_ptr.hbm [resolvable:$true] %s431
          %437 = dma.vmem_to_hbm [thread:$0]  %s430, 512, %s432, %s416, 64, 64, 4
        $region48: #{tpu_custom_call.1} parent=27 // pred_fallthru
          _
      $region28: #{tpu_custom_call.1} parent=5 // pred_fallthru
        _
      %p438 = scmp.le.s32.totalorder 2, %s15
      // Predicated region
      $region49: #{tpu_custom_call.1} parent=5 // pred_check
        %p439 = pneg %p438
      $region50: #{tpu_custom_call.1} parent=5 // pred_check_branch
        %441 = sbr.rel (%p439) target = $region52
      $region51: #{tpu_custom_call.1} parent=5 // pred_region
        %s442 = ssub.s32 %s15, 2
        // Predicated region
        $region53: #{tpu_custom_call.1} parent=51 // pred_check
          %p443 = pneg %p121
        $region54: #{tpu_custom_call.1} parent=51 // pred_check_branch
          %445 = sbr.rel (%p443) target = $region56
        $region55: #{tpu_custom_call.1} parent=51 // pred_region
          %s446 = sand.u32 %s106, 1
          %s447 = scalar_lea.sflag [#allocation5], %s446
          %s448 = sand.u32 %s106, 1
          %s449 = smul.addr %s448, 32
          %s450 = scalar_lea.vmem [#allocation8], %s449
          %452 = dma.done %s447, 512
        $region56: #{tpu_custom_call.1} parent=51 // pred_fallthru
          _
      $region52: #{tpu_custom_call.1} parent=5 // pred_fallthru
        _
    $region6: #{tpu_custom_call.1} parent=1 // loop_footer
      %s19 = sadd.s32 1, %s15
    $region7: #{tpu_custom_call.1} parent=1 // loop_footer_branch
      %14 = sbr.rel target = $region3
    $region8: #{tpu_custom_call.1} parent=1 // loop_exit
      _
    %453 = vsyncpa [#allocation4], 1
    %s454 = scalar_lea.sflag [#allocation4], 1
    %455 = vsyncpa %s454, 1
    %456 = vsyncpa [#allocation7], 1
    %457 = vsyncpa [#allocation5], 1
    %s458 = scalar_lea.sflag [#allocation5], 1
    %459 = vsyncpa %s458, 1

</llo_original>
